<compile_context>
chip_gen: v7x
topology: tpu7x:2x2x1
jax: 0.10.0
libtpu: 0.0.40
codegen_flags: <defaults>
</compile_context>

<pallas_src>
import jax
import jax.numpy as jnp
from jax.experimental import pallas as pl
from jax.experimental.pallas import tpu as pltpu

_LANES = 128


def _plan_spatial(hw, c_in, c_out, budget_bytes=4 << 20, rows_cap=512):
    """Pad HW up to a lane multiple and pick the rows-per-block (sublane) tile.

    Returns (hw_padded, rows_total, rows_tile).  rows_tile is either a multiple
    of 8 that divides rows_total, or the full rows_total extent (block dim ==
    full array dim is always legal).  The tile is sized so the double-buffered
    f32 in+out block set stays within `budget_bytes` (safe under v5e's 16 MiB
    scoped-VMEM default).
    """
    hw_p = -(-hw // _LANES) * _LANES
    rows = hw_p // _LANES
    bytes_per_row = (c_in + c_out) * _LANES * 4 * 2  # f32 in+out, double-buffered
    cap = min(rows_cap, budget_bytes // bytes_per_row)
    cap = max(8, cap - cap % 8)
    if rows <= cap:
        return hw_p, rows, rows
    for s in range(cap, 7, -8):
        if rows % s == 0:
            return hw_p, rows, s
    # No sublane-aligned divisor <= cap: pad rows to a multiple of 8 so one exists.
    rows = -(-rows // 8) * 8
    hw_p = rows * _LANES
    for s in range(cap, 7, -8):
        if rows % s == 0:
            return hw_p, rows, s
    return hw_p, rows, 8


def _make_kernel(c_in, c_out, b_tile):
    def kernel(w_ref, b_ref, x_ref, o_ref):
        # w_ref: (c_out*c_in,) f32 in SMEM  (w[co, ci] at index co*c_in + ci)
        # b_ref: (c_out,)      f32 in SMEM
        # x_ref: (b_tile, c_in,  S, 128) VMEM block (full-sublane spatial slabs)
        # o_ref: (b_tile, c_out, S, 128) VMEM block
        for b in range(b_tile):
            # Hoist the c_in input slabs once; each is a full (S, 128) block.
            x_rows = [x_ref[b, ci] for ci in range(c_in)]
            for co in range(c_out):
                acc = x_rows[0] * w_ref[co * c_in + 0]
                for ci in range(1, c_in):
                    acc = acc + x_rows[ci] * w_ref[co * c_in + ci]
                acc = acc + b_ref[co]
                # EUP sigmoid: exp + approx reciprocal both use the EUP slot;
                # the (S, 128) store is a full, unmasked vst when S % 8 == 0.
                o_ref[b, co] = pl.reciprocal(
                    1.0 + jnp.exp(-acc), approx=True
                ).astype(o_ref.dtype)

    return kernel


def heatmap_net_forward(x_nchw, weight, bias):
    """1x1 Conv2d + Sigmoid, semantics identical to the PyTorch HeatmapNet.

    Args:
      x_nchw : (N, C_in, H, W) float32
      weight : (C_out, C_in, 1, 1) float32  (PyTorch conv weight layout)
      bias   : (C_out,) float32
    Returns:
      (N, C_out, H, W) float32
    """
    N, C_in, H, W = x_nchw.shape
    C_out = weight.shape[0]
    HW = H * W

    hw_p, rows, s_tile = _plan_spatial(HW, C_in, C_out)

    # Free reshape (row-major split); pad only if HW is not a lane multiple.
    x3 = x_nchw.reshape(N, C_in, HW)
    if hw_p != HW:
        x3 = jnp.pad(x3, ((0, 0), (0, 0), (0, hw_p - HW)))
    x4 = x3.reshape(N, C_in, rows, _LANES)

    w_flat = weight.reshape(C_out * C_in).astype(jnp.float32)
    b_flat = bias.reshape(C_out).astype(jnp.float32)

    # Tiny problems: whole tensor in a single block -> a single grid step
    # (per-step overhead would otherwise dominate a few-hundred-KB problem).
    total_bytes = (C_in + C_out) * N * rows * _LANES * 4
    if total_bytes <= (1 << 20):
        b_tile, s_tile = N, rows
    else:
        b_tile = 1

    grid = (N // b_tile, rows // s_tile)

    out4 = pl.pallas_call(
        _make_kernel(C_in, C_out, b_tile),
        out_shape=jax.ShapeDtypeStruct((N, C_out, rows, _LANES), x_nchw.dtype),
        grid_spec=pltpu.PrefetchScalarGridSpec(
            num_scalar_prefetch=0,
            grid=grid,
            in_specs=[
                # tiny parameter vectors live in SMEM (scalar reads feed the FMAs)
                pl.BlockSpec(memory_space=pltpu.MemorySpace.SMEM),
                pl.BlockSpec(memory_space=pltpu.MemorySpace.SMEM),
                # activations: (b_tile, C_in, S, 128) block, full-sublane slabs
                pl.BlockSpec((b_tile, C_in, s_tile, _LANES),
                             lambda n, m: (n, 0, m, 0)),
            ],
            out_specs=pl.BlockSpec((b_tile, C_out, s_tile, _LANES),
                                   lambda n, m: (n, 0, m, 0)),
        ),
        compiler_params=pltpu.CompilerParams(
            dimension_semantics=("parallel", "parallel"),
        ),
    )(w_flat, b_flat, x4)

    out3 = out4.reshape(N, C_out, hw_p)
    if hw_p != HW:
        out3 = out3[:, :, :HW]
    return out3.reshape(N, C_out, H, W)


if __name__ == "__main__":
    # Small shapes consistent with the module: batch=2, in_channels=4, 16x16 spatial.
    N, C_in, H, W = 2, 4, 16, 16
    C_out = 3

    key = jax.random.PRNGKey(0)
    k_x, k_w, k_b = jax.random.split(key, 3)

    x = jax.random.normal(k_x, (N, C_in, H, W), dtype=jnp.float32)
    weight = jax.random.normal(k_w, (C_out, C_in, 1, 1), dtype=jnp.float32) * 0.1
    bias = jax.random.normal(k_b, (C_out,), dtype=jnp.float32) * 0.1

    out = heatmap_net_forward(x, weight, bias)
    out = jax.block_until_ready(out)

    # Correctness check against a pure-JAX reference of the same math.
    ref = jax.nn.sigmoid(
        jnp.einsum("nchw,oc->nohw", x, weight.reshape(C_out, C_in))
        + bias[None, :, None, None]
    )
    assert out.shape == (N, C_out, H, W)
    # Tolerance sized for the EUP approximate-reciprocal sigmoid (a few 1e-5
    # relative error on the denominator), well inside 2e-3 absolute.
    max_err = float(jnp.max(jnp.abs(out - ref)))
    assert jnp.allclose(out, ref, atol=2e-3, rtol=2e-3), max_err

    print("KERNEL_OK")
</pallas_src>

<mosaic_0001>
module attributes {stable_mosaic.version = 11 : i64} {
  func.func @kernel(%arg0: i32, %arg1: i32, %arg2: memref<12xf32, #tpu.memory_space<smem>>, %arg3: memref<3xf32, #tpu.memory_space<smem>>, %arg4: memref<2x4x2x128xf32, #tpu.memory_space<vmem>>, %arg5: memref<2x3x2x128xf32, #tpu.memory_space<vmem>>) attributes {dimension_semantics = [#tpu.dimension_semantics<parallel>, #tpu.dimension_semantics<parallel>], iteration_bounds = array<i64: 1, 1>, scalar_prefetch = 0 : i64, scratch_operands = 0 : i64, tpu.core_type = #tpu.core_type<tc>, window_params = [{transform_indices = @transform_0, window_bounds = array<i64: 12>}, {transform_indices = @transform_1, window_bounds = array<i64: 3>}, {transform_indices = @transform_2, window_bounds = array<i64: 2, 4, 2, 128>}, {transform_indices = @transform_3, window_bounds = array<i64: 2, 3, 2, 128>}]} {
    %c0 = arith.constant 0 : index
    %c0_0 = arith.constant 0 : index
    %c0_1 = arith.constant 0 : index
    %c0_2 = arith.constant 0 : index
    %0 = vector.load %arg4[%c0, %c0_0, %c0_1, %c0_2] : memref<2x4x2x128xf32, #tpu.memory_space<vmem>>, vector<1x1x2x128xf32>
    %1 = vector.shape_cast %0 : vector<1x1x2x128xf32> to vector<2x128xf32>
    %c0_3 = arith.constant 0 : index
    %c1 = arith.constant 1 : index
    %c0_4 = arith.constant 0 : index
    %c0_5 = arith.constant 0 : index
    %2 = vector.load %arg4[%c0_3, %c1, %c0_4, %c0_5] : memref<2x4x2x128xf32, #tpu.memory_space<vmem>>, vector<1x1x2x128xf32>
    %3 = vector.shape_cast %2 : vector<1x1x2x128xf32> to vector<2x128xf32>
    %c0_6 = arith.constant 0 : index
    %c2 = arith.constant 2 : index
    %c0_7 = arith.constant 0 : index
    %c0_8 = arith.constant 0 : index
    %4 = vector.load %arg4[%c0_6, %c2, %c0_7, %c0_8] : memref<2x4x2x128xf32, #tpu.memory_space<vmem>>, vector<1x1x2x128xf32>
    %5 = vector.shape_cast %4 : vector<1x1x2x128xf32> to vector<2x128xf32>
    %c0_9 = arith.constant 0 : index
    %c3 = arith.constant 3 : index
    %c0_10 = arith.constant 0 : index
    %c0_11 = arith.constant 0 : index
    %6 = vector.load %arg4[%c0_9, %c3, %c0_10, %c0_11] : memref<2x4x2x128xf32, #tpu.memory_space<vmem>>, vector<1x1x2x128xf32>
    %7 = vector.shape_cast %6 : vector<1x1x2x128xf32> to vector<2x128xf32>
    %c0_12 = arith.constant 0 : index
    %8 = memref.load %arg2[%c0_12] : memref<12xf32, #tpu.memory_space<smem>>
    %9 = vector.broadcast %8 : f32 to vector<2x128xf32>
    %10 = arith.mulf %1, %9 : vector<2x128xf32>
    %c1_13 = arith.constant 1 : index
    %11 = memref.load %arg2[%c1_13] : memref<12xf32, #tpu.memory_space<smem>>
    %12 = vector.broadcast %11 : f32 to vector<2x128xf32>
    %13 = arith.mulf %3, %12 : vector<2x128xf32>
    %14 = arith.addf %10, %13 : vector<2x128xf32>
    %c2_14 = arith.constant 2 : index
    %15 = memref.load %arg2[%c2_14] : memref<12xf32, #tpu.memory_space<smem>>
    %16 = vector.broadcast %15 : f32 to vector<2x128xf32>
    %17 = arith.mulf %5, %16 : vector<2x128xf32>
    %18 = arith.addf %14, %17 : vector<2x128xf32>
    %c3_15 = arith.constant 3 : index
    %19 = memref.load %arg2[%c3_15] : memref<12xf32, #tpu.memory_space<smem>>
    %20 = vector.broadcast %19 : f32 to vector<2x128xf32>
    %21 = arith.mulf %7, %20 : vector<2x128xf32>
    %22 = arith.addf %18, %21 : vector<2x128xf32>
    %c0_16 = arith.constant 0 : index
    %23 = memref.load %arg3[%c0_16] : memref<3xf32, #tpu.memory_space<smem>>
    %24 = vector.broadcast %23 : f32 to vector<2x128xf32>
    %25 = arith.addf %22, %24 : vector<2x128xf32>
    %cst = arith.constant 0.000000e+00 : f32
    %26 = vector.broadcast %cst : f32 to vector<2x128xf32>
    %27 = arith.subf %26, %25 : vector<2x128xf32>
    %28 = math.exp %27 : vector<2x128xf32>
    %cst_17 = arith.constant 1.000000e+00 : f32
    %29 = vector.broadcast %cst_17 : f32 to vector<2x128xf32>
    %30 = arith.addf %29, %28 : vector<2x128xf32>
    %31 = tpu.reciprocal %30 {approx = true} : vector<2x128xf32> -> vector<2x128xf32>
    %c0_18 = arith.constant 0 : index
    %c0_19 = arith.constant 0 : index
    %c0_20 = arith.constant 0 : index
    %c0_21 = arith.constant 0 : index
    %32 = vector.load %arg5[%c0_18, %c0_19, %c0_20, %c0_21] : memref<2x3x2x128xf32, #tpu.memory_space<vmem>>, vector<1x1x2x128xf32>
    %33 = vector.shape_cast %32 : vector<1x1x2x128xf32> to vector<2x128xf32>
    %34 = vector.shape_cast %31 : vector<2x128xf32> to vector<1x1x2x128xf32>
    tpu.vector_store %arg5[%c0_18, %c0_19, %c0_20, %c0_21], %34 {strides = array<i32>} : memref<2x3x2x128xf32, #tpu.memory_space<vmem>>, vector<1x1x2x128xf32>,
    %c4 = arith.constant 4 : index
    %35 = memref.load %arg2[%c4] : memref<12xf32, #tpu.memory_space<smem>>
    %36 = vector.broadcast %35 : f32 to vector<2x128xf32>
    %37 = arith.mulf %1, %36 : vector<2x128xf32>
    %c5 = arith.constant 5 : index
    %38 = memref.load %arg2[%c5] : memref<12xf32, #tpu.memory_space<smem>>
    %39 = vector.broadcast %38 : f32 to vector<2x128xf32>
    %40 = arith.mulf %3, %39 : vector<2x128xf32>
    %41 = arith.addf %37, %40 : vector<2x128xf32>
    %c6 = arith.constant 6 : index
    %42 = memref.load %arg2[%c6] : memref<12xf32, #tpu.memory_space<smem>>
    %43 = vector.broadcast %42 : f32 to vector<2x128xf32>
    %44 = arith.mulf %5, %43 : vector<2x128xf32>
    %45 = arith.addf %41, %44 : vector<2x128xf32>
    %c7 = arith.constant 7 : index
    %46 = memref.load %arg2[%c7] : memref<12xf32, #tpu.memory_space<smem>>
    %47 = vector.broadcast %46 : f32 to vector<2x128xf32>
    %48 = arith.mulf %7, %47 : vector<2x128xf32>
    %49 = arith.addf %45, %48 : vector<2x128xf32>
    %c1_22 = arith.constant 1 : index
    %50 = memref.load %arg3[%c1_22] : memref<3xf32, #tpu.memory_space<smem>>
    %51 = vector.broadcast %50 : f32 to vector<2x128xf32>
    %52 = arith.addf %49, %51 : vector<2x128xf32>
    %cst_23 = arith.constant 0.000000e+00 : f32
    %53 = vector.broadcast %cst_23 : f32 to vector<2x128xf32>
    %54 = arith.subf %53, %52 : vector<2x128xf32>
    %55 = math.exp %54 : vector<2x128xf32>
    %cst_24 = arith.constant 1.000000e+00 : f32
    %56 = vector.broadcast %cst_24 : f32 to vector<2x128xf32>
    %57 = arith.addf %56, %55 : vector<2x128xf32>
    %58 = tpu.reciprocal %57 {approx = true} : vector<2x128xf32> -> vector<2x128xf32>
    %c0_25 = arith.constant 0 : index
    %c1_26 = arith.constant 1 : index
    %c0_27 = arith.constant 0 : index
    %c0_28 = arith.constant 0 : index
    %59 = vector.load %arg5[%c0_25, %c1_26, %c0_27, %c0_28] : memref<2x3x2x128xf32, #tpu.memory_space<vmem>>, vector<1x1x2x128xf32>
    %60 = vector.shape_cast %59 : vector<1x1x2x128xf32> to vector<2x128xf32>
    %61 = vector.shape_cast %58 : vector<2x128xf32> to vector<1x1x2x128xf32>
    tpu.vector_store %arg5[%c0_25, %c1_26, %c0_27, %c0_28], %61 {strides = array<i32>} : memref<2x3x2x128xf32, #tpu.memory_space<vmem>>, vector<1x1x2x128xf32>,
    %c8 = arith.constant 8 : index
    %62 = memref.load %arg2[%c8] : memref<12xf32, #tpu.memory_space<smem>>
    %63 = vector.broadcast %62 : f32 to vector<2x128xf32>
    %64 = arith.mulf %1, %63 : vector<2x128xf32>
    %c9 = arith.constant 9 : index
    %65 = memref.load %arg2[%c9] : memref<12xf32, #tpu.memory_space<smem>>
    %66 = vector.broadcast %65 : f32 to vector<2x128xf32>
    %67 = arith.mulf %3, %66 : vector<2x128xf32>
    %68 = arith.addf %64, %67 : vector<2x128xf32>
    %c10 = arith.constant 10 : index
    %69 = memref.load %arg2[%c10] : memref<12xf32, #tpu.memory_space<smem>>
    %70 = vector.broadcast %69 : f32 to vector<2x128xf32>
    %71 = arith.mulf %5, %70 : vector<2x128xf32>
    %72 = arith.addf %68, %71 : vector<2x128xf32>
    %c11 = arith.constant 11 : index
    %73 = memref.load %arg2[%c11] : memref<12xf32, #tpu.memory_space<smem>>
    %74 = vector.broadcast %73 : f32 to vector<2x128xf32>
    %75 = arith.mulf %7, %74 : vector<2x128xf32>
    %76 = arith.addf %72, %75 : vector<2x128xf32>
    %c2_29 = arith.constant 2 : index
    %77 = memref.load %arg3[%c2_29] : memref<3xf32, #tpu.memory_space<smem>>
    %78 = vector.broadcast %77 : f32 to vector<2x128xf32>
    %79 = arith.addf %76, %78 : vector<2x128xf32>
    %cst_30 = arith.constant 0.000000e+00 : f32
    %80 = vector.broadcast %cst_30 : f32 to vector<2x128xf32>
    %81 = arith.subf %80, %79 : vector<2x128xf32>
    %82 = math.exp %81 : vector<2x128xf32>
    %cst_31 = arith.constant 1.000000e+00 : f32
    %83 = vector.broadcast %cst_31 : f32 to vector<2x128xf32>
    %84 = arith.addf %83, %82 : vector<2x128xf32>
    %85 = tpu.reciprocal %84 {approx = true} : vector<2x128xf32> -> vector<2x128xf32>
    %c0_32 = arith.constant 0 : index
    %c2_33 = arith.constant 2 : index
    %c0_34 = arith.constant 0 : index
    %c0_35 = arith.constant 0 : index
    %86 = vector.load %arg5[%c0_32, %c2_33, %c0_34, %c0_35] : memref<2x3x2x128xf32, #tpu.memory_space<vmem>>, vector<1x1x2x128xf32>
    %87 = vector.shape_cast %86 : vector<1x1x2x128xf32> to vector<2x128xf32>
    %88 = vector.shape_cast %85 : vector<2x128xf32> to vector<1x1x2x128xf32>
    tpu.vector_store %arg5[%c0_32, %c2_33, %c0_34, %c0_35], %88 {strides = array<i32>} : memref<2x3x2x128xf32, #tpu.memory_space<vmem>>, vector<1x1x2x128xf32>,
    %c1_36 = arith.constant 1 : index
    %c0_37 = arith.constant 0 : index
    %c0_38 = arith.constant 0 : index
    %c0_39 = arith.constant 0 : index
    %89 = vector.load %arg4[%c1_36, %c0_37, %c0_38, %c0_39] : memref<2x4x2x128xf32, #tpu.memory_space<vmem>>, vector<1x1x2x128xf32>
    %90 = vector.shape_cast %89 : vector<1x1x2x128xf32> to vector<2x128xf32>
    %c1_40 = arith.constant 1 : index
    %c1_41 = arith.constant 1 : index
    %c0_42 = arith.constant 0 : index
    %c0_43 = arith.constant 0 : index
    %91 = vector.load %arg4[%c1_40, %c1_41, %c0_42, %c0_43] : memref<2x4x2x128xf32, #tpu.memory_space<vmem>>, vector<1x1x2x128xf32>
    %92 = vector.shape_cast %91 : vector<1x1x2x128xf32> to vector<2x128xf32>
    %c1_44 = arith.constant 1 : index
    %c2_45 = arith.constant 2 : index
    %c0_46 = arith.constant 0 : index
    %c0_47 = arith.constant 0 : index
    %93 = vector.load %arg4[%c1_44, %c2_45, %c0_46, %c0_47] : memref<2x4x2x128xf32, #tpu.memory_space<vmem>>, vector<1x1x2x128xf32>
    %94 = vector.shape_cast %93 : vector<1x1x2x128xf32> to vector<2x128xf32>
    %c1_48 = arith.constant 1 : index
    %c3_49 = arith.constant 3 : index
    %c0_50 = arith.constant 0 : index
    %c0_51 = arith.constant 0 : index
    %95 = vector.load %arg4[%c1_48, %c3_49, %c0_50, %c0_51] : memref<2x4x2x128xf32, #tpu.memory_space<vmem>>, vector<1x1x2x128xf32>
    %96 = vector.shape_cast %95 : vector<1x1x2x128xf32> to vector<2x128xf32>
    %c0_52 = arith.constant 0 : index
    %97 = memref.load %arg2[%c0_52] : memref<12xf32, #tpu.memory_space<smem>>
    %98 = vector.broadcast %97 : f32 to vector<2x128xf32>
    %99 = arith.mulf %90, %98 : vector<2x128xf32>
    %c1_53 = arith.constant 1 : index
    %100 = memref.load %arg2[%c1_53] : memref<12xf32, #tpu.memory_space<smem>>
    %101 = vector.broadcast %100 : f32 to vector<2x128xf32>
    %102 = arith.mulf %92, %101 : vector<2x128xf32>
    %103 = arith.addf %99, %102 : vector<2x128xf32>
    %c2_54 = arith.constant 2 : index
    %104 = memref.load %arg2[%c2_54] : memref<12xf32, #tpu.memory_space<smem>>
    %105 = vector.broadcast %104 : f32 to vector<2x128xf32>
    %106 = arith.mulf %94, %105 : vector<2x128xf32>
    %107 = arith.addf %103, %106 : vector<2x128xf32>
    %c3_55 = arith.constant 3 : index
    %108 = memref.load %arg2[%c3_55] : memref<12xf32, #tpu.memory_space<smem>>
    %109 = vector.broadcast %108 : f32 to vector<2x128xf32>
    %110 = arith.mulf %96, %109 : vector<2x128xf32>
    %111 = arith.addf %107, %110 : vector<2x128xf32>
    %c0_56 = arith.constant 0 : index
    %112 = memref.load %arg3[%c0_56] : memref<3xf32, #tpu.memory_space<smem>>
    %113 = vector.broadcast %112 : f32 to vector<2x128xf32>
    %114 = arith.addf %111, %113 : vector<2x128xf32>
    %cst_57 = arith.constant 0.000000e+00 : f32
    %115 = vector.broadcast %cst_57 : f32 to vector<2x128xf32>
    %116 = arith.subf %115, %114 : vector<2x128xf32>
    %117 = math.exp %116 : vector<2x128xf32>
    %cst_58 = arith.constant 1.000000e+00 : f32
    %118 = vector.broadcast %cst_58 : f32 to vector<2x128xf32>
    %119 = arith.addf %118, %117 : vector<2x128xf32>
    %120 = tpu.reciprocal %119 {approx = true} : vector<2x128xf32> -> vector<2x128xf32>
    %c1_59 = arith.constant 1 : index
    %c0_60 = arith.constant 0 : index
    %c0_61 = arith.constant 0 : index
    %c0_62 = arith.constant 0 : index
    %121 = vector.load %arg5[%c1_59, %c0_60, %c0_61, %c0_62] : memref<2x3x2x128xf32, #tpu.memory_space<vmem>>, vector<1x1x2x128xf32>
    %122 = vector.shape_cast %121 : vector<1x1x2x128xf32> to vector<2x128xf32>
    %123 = vector.shape_cast %120 : vector<2x128xf32> to vector<1x1x2x128xf32>
    tpu.vector_store %arg5[%c1_59, %c0_60, %c0_61, %c0_62], %123 {strides = array<i32>} : memref<2x3x2x128xf32, #tpu.memory_space<vmem>>, vector<1x1x2x128xf32>,
    %c4_63 = arith.constant 4 : index
    %124 = memref.load %arg2[%c4_63] : memref<12xf32, #tpu.memory_space<smem>>
    %125 = vector.broadcast %124 : f32 to vector<2x128xf32>
    %126 = arith.mulf %90, %125 : vector<2x128xf32>
    %c5_64 = arith.constant 5 : index
    %127 = memref.load %arg2[%c5_64] : memref<12xf32, #tpu.memory_space<smem>>
    %128 = vector.broadcast %127 : f32 to vector<2x128xf32>
    %129 = arith.mulf %92, %128 : vector<2x128xf32>
    %130 = arith.addf %126, %129 : vector<2x128xf32>
    %c6_65 = arith.constant 6 : index
    %131 = memref.load %arg2[%c6_65] : memref<12xf32, #tpu.memory_space<smem>>
    %132 = vector.broadcast %131 : f32 to vector<2x128xf32>
    %133 = arith.mulf %94, %132 : vector<2x128xf32>
    %134 = arith.addf %130, %133 : vector<2x128xf32>
    %c7_66 = arith.constant 7 : index
    %135 = memref.load %arg2[%c7_66] : memref<12xf32, #tpu.memory_space<smem>>
    %136 = vector.broadcast %135 : f32 to vector<2x128xf32>
    %137 = arith.mulf %96, %136 : vector<2x128xf32>
    %138 = arith.addf %134, %137 : vector<2x128xf32>
    %c1_67 = arith.constant 1 : index
    %139 = memref.load %arg3[%c1_67] : memref<3xf32, #tpu.memory_space<smem>>
    %140 = vector.broadcast %139 : f32 to vector<2x128xf32>
    %141 = arith.addf %138, %140 : vector<2x128xf32>
    %cst_68 = arith.constant 0.000000e+00 : f32
    %142 = vector.broadcast %cst_68 : f32 to vector<2x128xf32>
    %143 = arith.subf %142, %141 : vector<2x128xf32>
    %144 = math.exp %143 : vector<2x128xf32>
    %cst_69 = arith.constant 1.000000e+00 : f32
    %145 = vector.broadcast %cst_69 : f32 to vector<2x128xf32>
    %146 = arith.addf %145, %144 : vector<2x128xf32>
    %147 = tpu.reciprocal %146 {approx = true} : vector<2x128xf32> -> vector<2x128xf32>
    %c1_70 = arith.constant 1 : index
    %c1_71 = arith.constant 1 : index
    %c0_72 = arith.constant 0 : index
    %c0_73 = arith.constant 0 : index
    %148 = vector.load %arg5[%c1_70, %c1_71, %c0_72, %c0_73] : memref<2x3x2x128xf32, #tpu.memory_space<vmem>>, vector<1x1x2x128xf32>
    %149 = vector.shape_cast %148 : vector<1x1x2x128xf32> to vector<2x128xf32>
    %150 = vector.shape_cast %147 : vector<2x128xf32> to vector<1x1x2x128xf32>
    tpu.vector_store %arg5[%c1_70, %c1_71, %c0_72, %c0_73], %150 {strides = array<i32>} : memref<2x3x2x128xf32, #tpu.memory_space<vmem>>, vector<1x1x2x128xf32>,
    %c8_74 = arith.constant 8 : index
    %151 = memref.load %arg2[%c8_74] : memref<12xf32, #tpu.memory_space<smem>>
    %152 = vector.broadcast %151 : f32 to vector<2x128xf32>
    %153 = arith.mulf %90, %152 : vector<2x128xf32>
    %c9_75 = arith.constant 9 : index
    %154 = memref.load %arg2[%c9_75] : memref<12xf32, #tpu.memory_space<smem>>
    %155 = vector.broadcast %154 : f32 to vector<2x128xf32>
    %156 = arith.mulf %92, %155 : vector<2x128xf32>
    %157 = arith.addf %153, %156 : vector<2x128xf32>
    %c10_76 = arith.constant 10 : index
    %158 = memref.load %arg2[%c10_76] : memref<12xf32, #tpu.memory_space<smem>>
    %159 = vector.broadcast %158 : f32 to vector<2x128xf32>
    %160 = arith.mulf %94, %159 : vector<2x128xf32>
    %161 = arith.addf %157, %160 : vector<2x128xf32>
    %c11_77 = arith.constant 11 : index
    %162 = memref.load %arg2[%c11_77] : memref<12xf32, #tpu.memory_space<smem>>
    %163 = vector.broadcast %162 : f32 to vector<2x128xf32>
    %164 = arith.mulf %96, %163 : vector<2x128xf32>
    %165 = arith.addf %161, %164 : vector<2x128xf32>
    %c2_78 = arith.constant 2 : index
    %166 = memref.load %arg3[%c2_78] : memref<3xf32, #tpu.memory_space<smem>>
    %167 = vector.broadcast %166 : f32 to vector<2x128xf32>
    %168 = arith.addf %165, %167 : vector<2x128xf32>
    %cst_79 = arith.constant 0.000000e+00 : f32
    %169 = vector.broadcast %cst_79 : f32 to vector<2x128xf32>
    %170 = arith.subf %169, %168 : vector<2x128xf32>
    %171 = math.exp %170 : vector<2x128xf32>
    %cst_80 = arith.constant 1.000000e+00 : f32
    %172 = vector.broadcast %cst_80 : f32 to vector<2x128xf32>
    %173 = arith.addf %172, %171 : vector<2x128xf32>
    %174 = tpu.reciprocal %173 {approx = true} : vector<2x128xf32> -> vector<2x128xf32>
    %c1_81 = arith.constant 1 : index
    %c2_82 = arith.constant 2 : index
    %c0_83 = arith.constant 0 : index
    %c0_84 = arith.constant 0 : index
    %175 = vector.load %arg5[%c1_81, %c2_82, %c0_83, %c0_84] : memref<2x3x2x128xf32, #tpu.memory_space<vmem>>, vector<1x1x2x128xf32>
    %176 = vector.shape_cast %175 : vector<1x1x2x128xf32> to vector<2x128xf32>
    %177 = vector.shape_cast %174 : vector<2x128xf32> to vector<1x1x2x128xf32>
    tpu.vector_store %arg5[%c1_81, %c2_82, %c0_83, %c0_84], %177 {strides = array<i32>} : memref<2x3x2x128xf32, #tpu.memory_space<vmem>>, vector<1x1x2x128xf32>,
    return
  }
  func.func @transform_0(%arg0: i32, %arg1: i32) -> i32 {
    %c0_i32 = arith.constant 0 : i32
    %c0_i32_0 = arith.constant 0 : i32
    return %c0_i32 : i32
  }
  func.func @transform_1(%arg0: i32, %arg1: i32) -> i32 {
    %c0_i32 = arith.constant 0 : i32
    %c0_i32_0 = arith.constant 0 : i32
    return %c0_i32 : i32
  }
  func.func @transform_2(%arg0: i32, %arg1: i32) -> (i32, i32, i32, i32) {
    %c0_i32 = arith.constant 0 : i32
    %c0_i32_0 = arith.constant 0 : i32
    %c0_i32_1 = arith.constant 0 : i32
    return %arg0, %c0_i32, %arg1, %c0_i32_0 : i32, i32, i32, i32
  }
  func.func @transform_3(%arg0: i32, %arg1: i32) -> (i32, i32, i32, i32) {
    %c0_i32 = arith.constant 0 : i32
    %c0_i32_0 = arith.constant 0 : i32
    %c0_i32_1 = arith.constant 0 : i32
    return %arg0, %c0_i32, %arg1, %c0_i32_0 : i32, i32, i32, i32
  }
}

</mosaic_0001>

<llo_original>
// kernel: tpu_custom_call.1
$region0: #{tpu_custom_call.1}
  #allocation0 [shape = 'u32[]', space=smem, size = 0x4, offset = 0x4, fixed_abs, tag = 'smem constant byte address 0x4 - core index']
  #allocation1 [shape = 'u32[144,128]{1,0:T(1,128)}', space=vmem, size = 0x12000, scoped, tag = 'internal scratch']
  %s0 = inlined_call_operand.hbm [shape: f32[12], index: 0, kind: input, shape index: {}]
  %s1 = inlined_call_operand.vmem [shape: f32[3], index: 1, kind: input, shape index: {}]
  %s2 = inlined_call_operand.hbm [shape: f32[2,4,2,128], index: 2, kind: input, shape index: {}]
  %s3 = inlined_call_operand.hbm [shape: f32[2,3,2,128], index: 3, kind: output, shape index: {}]
  %s4 = sld [smem:[#allocation0]]
  $region34: #{tpu_custom_call.1} parent=0
    _
  %s6 = ssub.s32 1, %s4
  %s7 = scalar_select 0, %s6, %s4
  $region1: #{tpu_custom_call.1} parent=0
    #allocation2 [shape = 'u8[512]{0}', space=smem, size = 0x200, scoped, tag = 'input window, operand 0, single buffered']
    #allocation3 [shape = 's32[1]{0}', space=sflag, size = 0x4, scoped, tag = 'scoped memory for tpu_custom_call.1']
    #allocation4 [shape = 's32[1]{0}', space=sflag, size = 0x4, scoped, tag = 'scoped memory for tpu_custom_call.1']
    #allocation5 [shape = 's32[1]{0}', space=sflag, size = 0x4, scoped, tag = 'scoped memory for tpu_custom_call.1']
    #allocation6 [shape = 's32[1]{0}', space=sflag, size = 0x4, scoped, tag = 'scoped memory for tpu_custom_call.1']
    #allocation7 [shape = 'u8[512]{0}', space=smem, size = 0x200, scoped, tag = 'input window, operand 1, single buffered']
    #allocation8 [shape = 'u8[8192]{0}', space=vmem, size = 0x2000, scoped, tag = 'input window, operand 2, single buffered']
    #allocation9 [shape = 'u8[6144]{0}', space=vmem, size = 0x1800, scoped, tag = 'output window, operand 0, single buffered']
    %8 = vsyncpa [#allocation5], 0
    %9 = vsyncpa [#allocation6], 0
    %10 = vsyncpa [#allocation3], 0
    %11 = vsyncpa [#allocation4], 0
    // Predicated region
    $region2: #{tpu_custom_call.1} parent=1 // pred_check
      _
    $region3: #{tpu_custom_call.1} parent=1 // pred_check_branch
      %13 = sbr.rel (0) target = $region5
    $region4: #{tpu_custom_call.1} parent=1 // pred_region
      %s15 = ssub.s32 16, 16
      %16 = vsyncadd [#allocation5], %s15
      %19 = dma.hbm_to_smem %s0, 16, [#allocation2], [#allocation5]
    $region5: #{tpu_custom_call.1} parent=1 // pred_fallthru
      _
    // Predicated region
    $region6: #{tpu_custom_call.1} parent=1 // pred_check
      _
    $region7: #{tpu_custom_call.1} parent=1 // pred_check_branch
      %21 = sbr.rel (0) target = $region9
    $region8: #{tpu_custom_call.1} parent=1 // pred_region
      %s23 = ssub.s32 16, 16
      %24 = vsyncadd [#allocation6], %s23
      %s26 = sshll.u32 %s1, 4
      %s27 = int_to_ptr.vmem [resolvable:$true] %s26
      %29 = dma.vmem_to_smem %s27, 16, [#allocation7], [#allocation6]
    $region9: #{tpu_custom_call.1} parent=1 // pred_fallthru
      _
    // Predicated region
    $region10: #{tpu_custom_call.1} parent=1 // pred_check
      _
    $region11: #{tpu_custom_call.1} parent=1 // pred_check_branch
      %31 = sbr.rel (0) target = $region13
    $region12: #{tpu_custom_call.1} parent=1 // pred_region
      %s33 = ssub.s32 256, 256
      %34 = vsyncadd [#allocation3], %s33
      %s35 = sshll.u32 [#allocation8], 4
      %s36 = int_to_ptr.vmem [resolvable:$true] %s35
      %41 = dma.hbm_to_vmem [thread:$0]  %s2, 256, %s36, [#allocation3], 32, 32, 2
    $region13: #{tpu_custom_call.1} parent=1 // pred_fallthru
      _
    // Predicated region
    $region14: #{tpu_custom_call.1} parent=1 // pred_check
      _
    $region15: #{tpu_custom_call.1} parent=1 // pred_check_branch
      %43 = sbr.rel (0) target = $region17
    $region16: #{tpu_custom_call.1} parent=1 // pred_region
      %44 = dma.done [#allocation5], 16
    $region17: #{tpu_custom_call.1} parent=1 // pred_fallthru
      _
    // Predicated region
    $region18: #{tpu_custom_call.1} parent=1 // pred_check
      _
    $region19: #{tpu_custom_call.1} parent=1 // pred_check_branch
      %46 = sbr.rel (0) target = $region21
    $region20: #{tpu_custom_call.1} parent=1 // pred_region
      %47 = dma.done [#allocation6], 16
    $region21: #{tpu_custom_call.1} parent=1 // pred_fallthru
      _
    // Predicated region
    $region22: #{tpu_custom_call.1} parent=1 // pred_check
      _
    $region23: #{tpu_custom_call.1} parent=1 // pred_check_branch
      %49 = sbr.rel (0) target = $region25
    $region24: #{tpu_custom_call.1} parent=1 // pred_region
      %50 = dma.done [#allocation3], 256
    $region25: #{tpu_custom_call.1} parent=1 // pred_fallthru
      _
    %51 = sfence
    %v52 = vld [vmem:[#allocation8] sm:$0x3]
    %s53 = scalar_lea.vmem [#allocation8], 2
    %v54 = vld [vmem:[%s53] sm:$0x3]
    %s55 = scalar_lea.vmem [#allocation8], 4
    %v56 = vld [vmem:[%s55] sm:$0x3]
    %s57 = scalar_lea.vmem [#allocation8], 6
    %v58 = vld [vmem:[%s57] sm:$0x3]
    %s59 = sld [smem:[#allocation2]]
    %v60 = vstv %s59
    %v61 = vmul.f32 %v52, %v60
    %s62 = sld [smem:[#allocation2 + $0x1]]
    %v63 = vstv %s62
    %v64 = vmul.f32 %v54, %v63
    %v65 = vadd.f32 %v61, %v64
    %s66 = sld [smem:[#allocation2 + $0x2]]
    %v67 = vstv %s66
    %v68 = vmul.f32 %v56, %v67
    %v69 = vadd.f32 %v65, %v68
    %s70 = sld [smem:[#allocation2 + $0x3]]
    %v71 = vstv %s70
    %v72 = vmul.f32 %v58, %v71
    %v73 = vadd.f32 %v69, %v72
    %s74 = sld [smem:[#allocation7]]
    %v75 = vstv %s74
    %v76 = vadd.f32 %v73, %v75
    %v77 = vsub.f32 0.0, %v76
    %v78 = vmul.f32 %v77, 1.442695
    %v79 = vpow.pop %v78
    %v80 = vadd.f32 %v79, 1.0
    %v81 = vrcp.pop %v80
    %82 = vst [vmem:[#allocation9] sm:$0x3] %v81
    %s83 = sld [smem:[#allocation2 + $0x4]]
    %v84 = vstv %s83
    %v85 = vmul.f32 %v52, %v84
    %s86 = sld [smem:[#allocation2 + $0x5]]
    %v87 = vstv %s86
    %v88 = vmul.f32 %v54, %v87
    %v89 = vadd.f32 %v85, %v88
    %s90 = sld [smem:[#allocation2 + $0x6]]
    %v91 = vstv %s90
    %v92 = vmul.f32 %v56, %v91
    %v93 = vadd.f32 %v89, %v92
    %s94 = sld [smem:[#allocation2 + $0x7]]
    %v95 = vstv %s94
    %v96 = vmul.f32 %v58, %v95
    %v97 = vadd.f32 %v93, %v96
    %s98 = sld [smem:[#allocation7 + $0x1]]
    %v99 = vstv %s98
    %v100 = vadd.f32 %v97, %v99
    %v101 = vsub.f32 0.0, %v100
    %v102 = vmul.f32 %v101, 1.442695
    %v103 = vpow.pop %v102
    %v104 = vadd.f32 %v103, 1.0
    %v105 = vrcp.pop %v104
    %s106 = scalar_lea.vmem [#allocation9], 2
    %107 = vst [vmem:[%s106] sm:$0x3] %v105
    %s108 = sld [smem:[#allocation2 + $0x8]]
    %v109 = vstv %s108
    %v110 = vmul.f32 %v52, %v109
    %s111 = sld [smem:[#allocation2 + $0x9]]
    %v112 = vstv %s111
    %v113 = vmul.f32 %v54, %v112
    %v114 = vadd.f32 %v110, %v113
    %s115 = sld [smem:[#allocation2 + $0xa]]
    %v116 = vstv %s115
    %v117 = vmul.f32 %v56, %v116
    %v118 = vadd.f32 %v114, %v117
    %s119 = sld [smem:[#allocation2 + $0xb]]
    %v120 = vstv %s119
    %v121 = vmul.f32 %v58, %v120
    %v122 = vadd.f32 %v118, %v121
    %s123 = sld [smem:[#allocation7 + $0x2]]
    %v124 = vstv %s123
    %v125 = vadd.f32 %v122, %v124
    %v126 = vsub.f32 0.0, %v125
    %v127 = vmul.f32 %v126, 1.442695
    %v128 = vpow.pop %v127
    %v129 = vadd.f32 %v128, 1.0
    %v130 = vrcp.pop %v129
    %s131 = scalar_lea.vmem [#allocation9], 4
    %132 = vst [vmem:[%s131] sm:$0x3] %v130
    %s133 = scalar_lea.vmem [#allocation8], 8
    %v134 = vld [vmem:[%s133] sm:$0x3]
    %s135 = scalar_lea.vmem [#allocation8], 10
    %v136 = vld [vmem:[%s135] sm:$0x3]
    %s137 = scalar_lea.vmem [#allocation8], 12
    %v138 = vld [vmem:[%s137] sm:$0x3]
    %s139 = scalar_lea.vmem [#allocation8], 14
    %v140 = vld [vmem:[%s139] sm:$0x3]
    %s141 = sld [smem:[#allocation2]]
    %v142 = vstv %s141
    %v143 = vmul.f32 %v134, %v142
    %s144 = sld [smem:[#allocation2 + $0x1]]
    %v145 = vstv %s144
    %v146 = vmul.f32 %v136, %v145
    %v147 = vadd.f32 %v143, %v146
    %s148 = sld [smem:[#allocation2 + $0x2]]
    %v149 = vstv %s148
    %v150 = vmul.f32 %v138, %v149
    %v151 = vadd.f32 %v147, %v150
    %s152 = sld [smem:[#allocation2 + $0x3]]
    %v153 = vstv %s152
    %v154 = vmul.f32 %v140, %v153
    %v155 = vadd.f32 %v151, %v154
    %s156 = sld [smem:[#allocation7]]
    %v157 = vstv %s156
    %v158 = vadd.f32 %v155, %v157
    %v159 = vsub.f32 0.0, %v158
    %v160 = vmul.f32 %v159, 1.442695
    %v161 = vpow.pop %v160
    %v162 = vadd.f32 %v161, 1.0
    %v163 = vrcp.pop %v162
    %s164 = scalar_lea.vmem [#allocation9], 6
    %165 = vst [vmem:[%s164] sm:$0x3] %v163
    %s166 = sld [smem:[#allocation2 + $0x4]]
    %v167 = vstv %s166
    %v168 = vmul.f32 %v134, %v167
    %s169 = sld [smem:[#allocation2 + $0x5]]
    %v170 = vstv %s169
    %v171 = vmul.f32 %v136, %v170
    %v172 = vadd.f32 %v168, %v171
    %s173 = sld [smem:[#allocation2 + $0x6]]
    %v174 = vstv %s173
    %v175 = vmul.f32 %v138, %v174
    %v176 = vadd.f32 %v172, %v175
    %s177 = sld [smem:[#allocation2 + $0x7]]
    %v178 = vstv %s177
    %v179 = vmul.f32 %v140, %v178
    %v180 = vadd.f32 %v176, %v179
    %s181 = sld [smem:[#allocation7 + $0x1]]
    %v182 = vstv %s181
    %v183 = vadd.f32 %v180, %v182
    %v184 = vsub.f32 0.0, %v183
    %v185 = vmul.f32 %v184, 1.442695
    %v186 = vpow.pop %v185
    %v187 = vadd.f32 %v186, 1.0
    %v188 = vrcp.pop %v187
    %s189 = scalar_lea.vmem [#allocation9], 8
    %190 = vst [vmem:[%s189] sm:$0x3] %v188
    %s191 = sld [smem:[#allocation2 + $0x8]]
    %v192 = vstv %s191
    %v193 = vmul.f32 %v134, %v192
    %s194 = sld [smem:[#allocation2 + $0x9]]
    %v195 = vstv %s194
    %v196 = vmul.f32 %v136, %v195
    %v197 = vadd.f32 %v193, %v196
    %s198 = sld [smem:[#allocation2 + $0xa]]
    %v199 = vstv %s198
    %v200 = vmul.f32 %v138, %v199
    %v201 = vadd.f32 %v197, %v200
    %s202 = sld [smem:[#allocation2 + $0xb]]
    %v203 = vstv %s202
    %v204 = vmul.f32 %v140, %v203
    %v205 = vadd.f32 %v201, %v204
    %s206 = sld [smem:[#allocation7 + $0x2]]
    %v207 = vstv %s206
    %v208 = vadd.f32 %v205, %v207
    %v209 = vsub.f32 0.0, %v208
    %v210 = vmul.f32 %v209, 1.442695
    %v211 = vpow.pop %v210
    %v212 = vadd.f32 %v211, 1.0
    %v213 = vrcp.pop %v212
    %s214 = scalar_lea.vmem [#allocation9], 10
    %215 = vst [vmem:[%s214] sm:$0x3] %v213
    // Predicated region
    $region26: #{tpu_custom_call.1} parent=1 // pred_check
      _
    $region27: #{tpu_custom_call.1} parent=1 // pred_check_branch
      %217 = sbr.rel (0) target = $region29
    $region28: #{tpu_custom_call.1} parent=1 // pred_region
      %s219 = ssub.s32 192, 192
      %220 = vsyncadd [#allocation4], %s219
      %s221 = sshll.u32 [#allocation9], 4
      %s222 = int_to_ptr.vmem [resolvable:$true] %s221
      %227 = dma.vmem_to_hbm [thread:$0]  %s222, 192, %s3, [#allocation4], 32, 32, 2
    $region29: #{tpu_custom_call.1} parent=1 // pred_fallthru
      _
    // Predicated region
    $region30: #{tpu_custom_call.1} parent=1 // pred_check
      _
    $region31: #{tpu_custom_call.1} parent=1 // pred_check_branch
      %229 = sbr.rel (0) target = $region33
    $region32: #{tpu_custom_call.1} parent=1 // pred_region
      %230 = dma.done [#allocation4], 192
    $region33: #{tpu_custom_call.1} parent=1 // pred_fallthru
      _
    %231 = vsyncpa [#allocation3], 1
    %232 = vsyncpa [#allocation4], 1
    %233 = vsyncpa [#allocation5], 1
    %234 = vsyncpa [#allocation6], 1

</llo_original>
